<compile_context>
chip_gen: v5e
topology: v5e:2x2
jax: 0.10.0
libtpu: 0.0.40
codegen_flags: <defaults>
</compile_context>

<pallas_src>
import math

import jax
import jax.numpy as jnp
from jax.experimental import pallas as pl
from jax.experimental.pallas import tpu as pltpu

_VMEM_LIMIT = 32 * 1024 * 1024  # raises v5e's 16 MiB scoped default; <= every chip's physical VMEM


# ----------------------------------------------------------------------------- tiling
def _pick_tile_p(P, D, itemsize, tile_p=None, budget_bytes=2 << 20):
    """Rows-per-tile along P. Keeps a double-buffered (tp, D) tile a couple MiB."""
    if tile_p is None:
        tp = budget_bytes // max(1, D * itemsize)
        tp = (tp // 8) * 8
    else:
        tp = int(tile_p)
    if tp >= P or tp < 8 or (P % 8 != 0):
        # Single full-P tile (block == full array dim is always layout-legal).
        # TODO(synk): pad P to a multiple of 8 on the host for huge, odd P.
        return P, 1
    return tp, pl.cdiv(P, tp)


# ----------------------------------------------------------------------------- row kernel
def _make_row_kernel(P_true, D, tp):
    inv_p = 1.0 / P_true
    inv_d = 1.0 / D

    def kernel(am_ref, pos_ref, out_ref, ysum_ref):
        p = pl.program_id(0)

        @pl.when(p == 0)
        def _():
            ysum_ref[...] = jnp.zeros_like(ysum_ref)

        y = pos_ref[...].astype(jnp.float32)                      # (tp, D), native->f32 in VMEM
        row = jax.lax.broadcasted_iota(jnp.int32, y.shape, 0) + p * tp
        y = jnp.where(row < P_true, y, 0.0)                       # mask OOB tail rows
        ysum_ref[...] += jnp.sum(y, axis=0, keepdims=True)        # accumulate sum_p(pos), (1, D)

        @pl.when(p == pl.num_programs(0) - 1)
        def _():
            x = am_ref[...].astype(jnp.float32)                   # (L, D) row logits
            ybar = ysum_ref[...] * inv_p                          # mean_p(pos) with TRUE P
            # stable BCE-with-logits, mean_p folded into ybar:
            #   mean_{p,d} BCE(x, y) = mean_d[ max(x,0) + log1p(exp(-|x|)) - x*mean_p(y) ]
            terms = jnp.maximum(x, 0.0) + jnp.log1p(jnp.exp(-jnp.abs(x))) - x * ybar
            out_ref[0, 0] = jnp.sum(terms) * inv_d                # sum_l mean_d

    return kernel


def _match_loss_rows(am_rows, pos2d, tile_p=None):
    """am_rows: (L, D), pos2d: (P, D) (native dtypes) -> (1,1) f32 = sum_l mean BCE."""
    L, D = am_rows.shape
    P, _ = pos2d.shape
    tp, grid_p = _pick_tile_p(P, D, pos2d.dtype.itemsize, tile_p)
    return pl.pallas_call(
        _make_row_kernel(P, D, tp),
        out_shape=jax.ShapeDtypeStruct((1, 1), jnp.float32),
        grid=(grid_p,),
        in_specs=[
            pl.BlockSpec((L, D), lambda p: (0, 0)),    # Am rows resident across the P grid
            pl.BlockSpec((tp, D), lambda p: (p, 0)),   # pipelined pos tiles
        ],
        out_specs=pl.BlockSpec((1, 1), lambda p: (0, 0),
                               memory_space=pltpu.MemorySpace.SMEM),
        scratch_shapes=[pltpu.VMEM((1, D), jnp.float32)],
        compiler_params=pltpu.CompilerParams(
            dimension_semantics=("arbitrary",),        # reduction over P
            vmem_limit_bytes=_VMEM_LIMIT,
        ),
    )(am_rows, pos2d)


# ----------------------------------------------------------------------------- full kernel
def _make_full_kernel(P_true, D, tp):
    inv_n = 1.0 / (P_true * D)

    def kernel(am_ref, pos_ref, out_ref, acc_ref):
        p = pl.program_id(0)
        l = pl.program_id(1)

        @pl.when(jnp.logical_and(p == 0, l == 0))
        def _():
            acc_ref[0] = 0.0

        x = am_ref[...].astype(jnp.float32)            # (1, tp, D)
        y = pos_ref[...].astype(jnp.float32)           # (tp, D)
        bce = jnp.maximum(x, 0.0) - x * y[None] + jnp.log1p(jnp.exp(-jnp.abs(x)))
        row = jax.lax.broadcasted_iota(jnp.int32, bce.shape, 1) + p * tp
        bce = jnp.where(row < P_true, bce, 0.0)        # mask OOB tail rows
        acc_ref[0] += jnp.sum(bce)

        @pl.when(jnp.logical_and(p == pl.num_programs(0) - 1,
                                 l == pl.num_programs(1) - 1))
        def _():
            out_ref[0, 0] = acc_ref[0] * inv_n         # divide by the TRUE P*D

    return kernel


def _match_loss_full(am_full, pos2d, tile_p=None):
    """am_full: (L, P, D), pos2d: (P, D) (native dtypes) -> (1,1) f32 = sum_l mean BCE."""
    L, P, D = am_full.shape
    tp, grid_p = _pick_tile_p(P, D,
                              max(am_full.dtype.itemsize, pos2d.dtype.itemsize),
                              tile_p, budget_bytes=1 << 20)
    # Grid order (P outer, L inner): each pos tile is DMA'd once and reused for all l,
    # so HBM traffic is L*P*D (am) + P*D (pos), not 2*L*P*D.
    # TODO(synk): on v7x, shard the L axis across the 2 TensorCores ("parallel"
    # semantics with per-core partial outputs summed in the wrapper).
    return pl.pallas_call(
        _make_full_kernel(P, D, tp),
        out_shape=jax.ShapeDtypeStruct((1, 1), jnp.float32),
        grid=(grid_p, L),
        in_specs=[
            pl.BlockSpec((1, tp, D), lambda p, l: (l, p, 0)),
            pl.BlockSpec((tp, D), lambda p, l: (p, 0)),
        ],
        out_specs=pl.BlockSpec((1, 1), lambda p, l: (0, 0),
                               memory_space=pltpu.MemorySpace.SMEM),
        scratch_shapes=[pltpu.SMEM((1,), jnp.float32)],
        compiler_params=pltpu.CompilerParams(
            dimension_semantics=("arbitrary", "arbitrary"),
            vmem_limit_bytes=_VMEM_LIMIT,
        ),
    )(am_full, pos2d)


# ----------------------------------------------------------------------------- wrapper
def _is_row_broadcast(a, feat, D):
    """True iff Am_z.expand_as(pos) replicates `a` identically across the P axis."""
    if a.size != D:
        return False
    k = min(a.ndim, len(feat))
    if k and tuple(a.shape[a.ndim - k:]) != tuple(feat[len(feat) - k:]):
        return False
    return all(s == 1 for s in a.shape[: a.ndim - k])


def match_loss_forward(Am_a_list, pos_a_list, neg_a_list=None, *, tile_p=None):
    """JAX/Pallas equivalent of MatchLoss.forward (inputs stay in native dtype)."""
    if not isinstance(Am_a_list, list):
        # Reference non-list path: torch.FloatTensor(Am_a_list).mean() — trivial
        # scalar mean, done in plain JAX (not worth a kernel).
        return jnp.asarray(Am_a_list, dtype=jnp.float32).mean()

    # pos: accept either a list of (*feat) arrays or an already-stacked (P, *feat)
    # array (avoids a per-call concat that doubles traffic on a memory-bound op).
    if isinstance(pos_a_list, (list, tuple)):
        pos_stacked = jnp.stack([jnp.asarray(p) for p in pos_a_list])
    else:
        pos_stacked = jnp.asarray(pos_a_list)
    P = pos_stacked.shape[0]
    feat = tuple(pos_stacked.shape[1:])
    D = int(math.prod(feat))
    pos2d = pos_stacked.reshape(P, D)
    # neg_a_list is stacked by the reference but never used (neg_loss == 0).

    ams = [jnp.asarray(a) for a in Am_a_list]
    if not ams:
        return jnp.asarray(0.0, jnp.float32)

    row_group, full_group = [], []
    for a in ams:
        if _is_row_broadcast(a, feat, D):
            row_group.append(a.reshape(D))                 # no P-way broadcast ever built
        elif tuple(a.shape) == tuple(pos_stacked.shape):
            full_group.append(a.reshape(P, D))             # expand_as is a no-op here
        else:
            # Rare: partial broadcast (some singleton feature dims, non-singleton P).
            # TODO(synk): broadcast inside the kernel to avoid materializing this.
            full_group.append(jnp.broadcast_to(a, pos_stacked.shape).reshape(P, D))

    total = jnp.asarray(0.0, jnp.float32)
    if row_group:
        am_rows = jnp.stack(row_group)                     # (Lr, D), native dtype
        total = total + _match_loss_rows(am_rows, pos2d, tile_p=tile_p)[0, 0]
    if full_group:
        am_full = jnp.stack(full_group)                    # (Lf, P, D), native dtype
        total = total + _match_loss_full(am_full, pos2d, tile_p=tile_p)[0, 0]
    return total


# ----------------------------------------------------------------------------- test
if __name__ == "__main__":
    key = jax.random.PRNGKey(0)
    L, P, D = 3, 40, 128        # P=40 with tile 16 -> 3 grid steps, last one masked
    k_am, k_pos, k_neg = jax.random.split(key, 3)

    # Am_z of shape (1, D) -> exercises the expand_as((P, D)) row path
    Am_rows = [jax.random.normal(jax.random.fold_in(k_am, i), (1, D), jnp.float32)
               for i in range(L)]
    # Am_z already full (P, D) -> exercises the full path
    Am_full = [jax.random.normal(jax.random.fold_in(k_am, 100 + i), (P, D), jnp.float32)
               for i in range(L)]
    pos_list = [jax.random.uniform(jax.random.fold_in(k_pos, i), (D,), jnp.float32)
                for i in range(P)]
    neg_list = [jax.random.uniform(jax.random.fold_in(k_neg, i), (D,), jnp.float32)
                for i in range(P)]
    pos_t = jnp.stack(pos_list)

    def ref_loss(am_list, pos):
        r = jnp.asarray(0.0, jnp.float32)
        y = pos.astype(jnp.float32)
        for a in am_list:
            x = jnp.broadcast_to(a.astype(jnp.float32), y.shape)
            bce = jnp.maximum(x, 0.0) - x * y + jnp.log1p(jnp.exp(-jnp.abs(x)))
            r = r + bce.mean()
        return r

    # 1) row-broadcast fast path, tiled P grid with a masked tail tile
    loss = match_loss_forward(Am_rows, pos_list, neg_list, tile_p=16)
    jax.block_until_ready(loss)
    ref = ref_loss(Am_rows, pos_t)
    assert jnp.allclose(loss, ref, rtol=1e-5, atol=1e-5), (loss, ref)

    # 2) full path, tiled (P, L) grid
    loss2 = match_loss_forward(Am_full, pos_list, neg_list, tile_p=16)
    jax.block_until_ready(loss2)
    ref2 = ref_loss(Am_full, pos_t)
    assert jnp.allclose(loss2, ref2, rtol=1e-5, atol=1e-5), (loss2, ref2)

    # 3) mixed list (rows + full), default tiling, pre-stacked pos
    mixed = [Am_rows[0], Am_full[1], Am_rows[2]]
    loss3 = match_loss_forward(mixed, pos_t, neg_list)
    jax.block_until_ready(loss3)
    ref3 = ref_loss(mixed, pos_t)
    assert jnp.allclose(loss3, ref3, rtol=1e-5, atol=1e-5), (loss3, ref3)

    # 4) native bf16 inputs stay bf16 through the DMA (upcast happens in-kernel)
    Am_bf16 = [a.astype(jnp.bfloat16) for a in Am_rows]
    pos_bf16 = pos_t.astype(jnp.bfloat16)
    loss4 = match_loss_forward(Am_bf16, pos_bf16, None, tile_p=16)
    jax.block_until_ready(loss4)
    ref4 = ref_loss(Am_bf16, pos_bf16)
    assert jnp.allclose(loss4, ref4, rtol=1e-4, atol=1e-4), (loss4, ref4)

    print("KERNEL_OK")
</pallas_src>

<mosaic_0001>
module attributes {stable_mosaic.version = 11 : i64} {
  func.func @kernel(%arg0: i32, %arg1: memref<3x128xf32, #tpu.memory_space<vmem>>, %arg2: memref<16x128xf32, #tpu.memory_space<vmem>>, %arg3: memref<1x1xf32, #tpu.memory_space<smem>>, %arg4: memref<1x128xf32, #tpu.memory_space<vmem>>) attributes {dimension_semantics = [#tpu.dimension_semantics<arbitrary>], iteration_bounds = array<i64: 3>, scalar_prefetch = 0 : i64, scratch_operands = 1 : i64, tpu.core_type = #tpu.core_type<tc>, window_params = [{pipeline_mode = #tpu.pipeline_mode<synchronous>, transform_indices = @transform_0, window_bounds = array<i64: 3, 128>}, {transform_indices = @transform_1, window_bounds = array<i64: 16, 128>}, {transform_indices = @transform_2, window_bounds = array<i64: 1, 1>}]} {
    %c0_i32 = arith.constant 0 : i32
    %0 = arith.cmpi eq, %arg0, %c0_i32 : i32
    %1 = arith.extui %0 : i1 to i32
    %c0_i32_0 = arith.constant 0 : i32
    %2 = arith.cmpi ne, %1, %c0_i32_0 : i32
    scf.if %2 {
      %cst_8 = arith.constant 0.000000e+00 : f32
      %20 = vector.broadcast %cst_8 : f32 to vector<1x128xf32>
      %c0_9 = arith.constant 0 : index
      %c0_10 = arith.constant 0 : index
      %21 = vector.load %arg4[%c0_9, %c0_10] : memref<1x128xf32, #tpu.memory_space<vmem>>, vector<1x128xf32>
      tpu.vector_store %arg4[%c0_9, %c0_10], %20 {strides = array<i32>} : memref<1x128xf32, #tpu.memory_space<vmem>>, vector<1x128xf32>,
    } else {
    }
    %c0 = arith.constant 0 : index
    %c0_1 = arith.constant 0 : index
    %3 = vector.load %arg2[%c0, %c0_1] : memref<16x128xf32, #tpu.memory_space<vmem>>, vector<16x128xf32>
    %4 = tpu.iota {dimensions = array<i32: 0>} : vector<16x128xi32>
    %c16_i32 = arith.constant 16 : i32
    %5 = arith.muli %arg0, %c16_i32 : i32
    %6 = vector.broadcast %5 : i32 to vector<16x128xi32>
    %7 = arith.addi %4, %6 : vector<16x128xi32>
    %c40_i32 = arith.constant 40 : i32
    %8 = vector.broadcast %c40_i32 : i32 to vector<16x128xi32>
    %9 = arith.cmpi slt, %7, %8 : vector<16x128xi32>
    %cst = arith.constant 0.000000e+00 : f32
    %10 = vector.broadcast %cst : f32 to vector<16x128xf32>
    %11 = arith.select %9, %3, %10 : vector<16x128xi1>, vector<16x128xf32>
    %c0_2 = arith.constant 0 : index
    %c0_3 = arith.constant 0 : index
    %12 = vector.load %arg4[%c0_2, %c0_3] : memref<1x128xf32, #tpu.memory_space<vmem>>, vector<1x128xf32>
    %cst_4 = arith.constant dense<0.000000e+00> : vector<128xf32>
    %13 = vector.multi_reduction <add>, %11, %cst_4 [0] : vector<16x128xf32> to vector<128xf32>
    %14 = vector.shape_cast %13 : vector<128xf32> to vector<1x128xf32>
    %15 = arith.addf %12, %14 : vector<1x128xf32>
    %c0_5 = arith.constant 0 : index
    %c0_6 = arith.constant 0 : index
    %16 = vector.load %arg4[%c0_5, %c0_6] : memref<1x128xf32, #tpu.memory_space<vmem>>, vector<1x128xf32>
    tpu.vector_store %arg4[%c0_5, %c0_6], %15 {strides = array<i32>} : memref<1x128xf32, #tpu.memory_space<vmem>>, vector<1x128xf32>,
    %c2_i32 = arith.constant 2 : i32
    %17 = arith.cmpi eq, %arg0, %c2_i32 : i32
    %18 = arith.extui %17 : i1 to i32
    %c0_i32_7 = arith.constant 0 : i32
    %19 = arith.cmpi ne, %18, %c0_i32_7 : i32
    scf.if %19 {
      %c0_8 = arith.constant 0 : index
      %c0_9 = arith.constant 0 : index
      %20 = vector.load %arg1[%c0_8, %c0_9] : memref<3x128xf32, #tpu.memory_space<vmem>>, vector<3x128xf32>
      %c0_10 = arith.constant 0 : index
      %c0_11 = arith.constant 0 : index
      %21 = vector.load %arg4[%c0_10, %c0_11] : memref<1x128xf32, #tpu.memory_space<vmem>>, vector<1x128xf32>
      %cst_12 = arith.constant 2.500000e-02 : f32
      %22 = vector.broadcast %cst_12 : f32 to vector<1x128xf32>
      %23 = arith.mulf %21, %22 : vector<1x128xf32>
      %cst_13 = arith.constant 0.000000e+00 : f32
      %24 = vector.broadcast %cst_13 : f32 to vector<3x128xf32>
      %25 = arith.maximumf %20, %24 : vector<3x128xf32>
      %26 = math.absf %20 : vector<3x128xf32>
      %cst_14 = arith.constant 0.000000e+00 : f32
      %27 = vector.broadcast %cst_14 : f32 to vector<3x128xf32>
      %28 = arith.subf %27, %26 : vector<3x128xf32>
      %29 = math.exp %28 : vector<3x128xf32>
      %30 = math.log1p %29 : vector<3x128xf32>
      %31 = arith.addf %25, %30 : vector<3x128xf32>
      %32 = vector.broadcast %23 : vector<1x128xf32> to vector<3x128xf32>
      %33 = arith.mulf %20, %32 : vector<3x128xf32>
      %34 = arith.subf %31, %33 : vector<3x128xf32>
      %35 = vector.shape_cast %34 : vector<3x128xf32> to vector<1x3x128xf32>
      %cst_15 = arith.constant dense<0.000000e+00> : vector<1xf32>
      %36 = vector.multi_reduction <add>, %35, %cst_15 [1, 2] : vector<1x3x128xf32> to vector<1xf32>
      %37 = vector.shape_cast %36 : vector<1xf32> to vector<1x1x1xf32>
      %38 = vector.extract %37[0, 0, 0] : f32 from vector<1x1x1xf32>
      %cst_16 = arith.constant 7.812500e-03 : f32
      %39 = arith.mulf %38, %cst_16 : f32
      %c0_17 = arith.constant 0 : index
      %c0_18 = arith.constant 0 : index
      %40 = memref.load %arg3[%c0_17, %c0_18] : memref<1x1xf32, #tpu.memory_space<smem>>
      memref.store %39, %arg3[%c0_17, %c0_18] : memref<1x1xf32, #tpu.memory_space<smem>>
    } else {
    }
    return
  }
  func.func @transform_0(%arg0: i32) -> (i32, i32) {
    %c0_i32 = arith.constant 0 : i32
    %c0_i32_0 = arith.constant 0 : i32
    %c0_i32_1 = arith.constant 0 : i32
    return %c0_i32, %c0_i32_0 : i32, i32
  }
  func.func @transform_1(%arg0: i32) -> (i32, i32) {
    %c0_i32 = arith.constant 0 : i32
    %c0_i32_0 = arith.constant 0 : i32
    return %arg0, %c0_i32 : i32, i32
  }
  func.func @transform_2(%arg0: i32) -> (i32, i32) {
    %c0_i32 = arith.constant 0 : i32
    %c0_i32_0 = arith.constant 0 : i32
    %c0_i32_1 = arith.constant 0 : i32
    return %c0_i32, %c0_i32_0 : i32, i32
  }
}

</mosaic_0001>

<llo_original>
// kernel: tpu_custom_call.1
$region0: #{tpu_custom_call.1}
  #allocation0 [shape = 'u32[]', space=smem, size = 0x4, offset = 0x4, fixed_abs, tag = 'smem constant byte address 0x4 - core index']
  #allocation1 [shape = 'u32[72,128]{1,0:T(1,128)}', space=vmem, size = 0x9000, scoped, tag = 'internal scratch']
  #allocation2 [shape = 'f32[1,128]{1,0:T(1,128)}', space=vmem, size = 0x200, scoped, tag = 'scratch operand']
  %s0 = inlined_call_operand.hbm [shape: f32[3,128], index: 0, kind: input, shape index: {}]
  %s1 = inlined_call_operand.hbm [shape: f32[40,128], index: 1, kind: input, shape index: {}]
  %s2 = inlined_call_operand.hbm [shape: f32[1,1], index: 2, kind: output, shape index: {}]
  %s3 = sld [smem:[#allocation0]]
  $region57: #{tpu_custom_call.1} parent=0
    _
  %s5 = ssub.s32 1, %s3
  %s6 = scalar_select 0, %s5, %s3
  $region1: #{tpu_custom_call.1} parent=0
    #allocation3 [shape = 'u8[2048]{0}', space=vmem, size = 0x800, scoped, tag = 'input window, operand 0, single buffered']
    #allocation4 [shape = 's32[2]{0}', space=sflag, size = 0x8, scoped, tag = 'scoped memory for tpu_custom_call.1']
    #allocation5 [shape = 's32[2]{0}', space=sflag, size = 0x8, scoped, tag = 'scoped memory for tpu_custom_call.1']
    #allocation6 [shape = 'u8[16384]{0}', space=vmem, size = 0x4000, scoped, tag = 'input window, operand 1']
    #allocation7 [shape = 's32[2]{0}', space=sflag, size = 0x8, scoped, tag = 'scoped memory for tpu_custom_call.1']
    #allocation8 [shape = 'u8[512]{0}', space=smem, size = 0x200, scoped, tag = 'output window, operand 0, single buffered']
    %7 = vsyncpa [#allocation4], 0
    %8 = vsyncpa [#allocation7], 0
    %s9 = scalar_lea.sflag [#allocation7], 1
    %10 = vsyncpa %s9, 0
    %11 = vsyncpa [#allocation5], 0
    loop: start=0, step=1, limit=5
    $region2: #{tpu_custom_call.1} parent=1 // loop_pre_header
      _
    $region3: #{tpu_custom_call.1} parent=1 // loop_header
      %s13 = sphi 0, %s17
      %p14 = scmp.ge.s32.totalorder %s13, 5
      %s21 = sphi 0, %s21
      %s23 = sphi 0, %s21
      %s24 = sphi 0, %s23
      %s38 = sphi 0, %s24
      %s44 = sphi 0, %s46
      %s47 = sphi 0, %s44
      %s48 = sphi 0, %s47
      %s64 = sphi 0, %s48
      %s68 = sphi 0, %s68
      %s70 = sphi 0, %s68
      %s71 = sphi 0, %s70
      %s85 = sphi 0, %s71
    $region4: #{tpu_custom_call.1} parent=1 // loop_header_branch
      %16 = sbr.rel (%p14) target = $region8
    $region5: #{tpu_custom_call.1} parent=1 // loop_body
      %s18 = ssub.s32 %s13, 1
      %s19 = ssub.s32 %s13, 2
      %s20 = sadd.s32 %s13, 1
      %s22 = sadd.s32 %s21, 1
      %p25 = scmp.eq.s32.totalorder %s13, 2
      %p26 = scmp.ne.s32.totalorder %s21, %s23
      %p27 = scmp.eq.s32.totalorder %s13, 0
      %p28 = por %p26, %p27
      %p29 = scmp.ne.s32.totalorder %s21, %s23
      %p30 = scmp.eq.s32.totalorder %s18, 2
      %p31 = por %p29, %p30
      %p32 = scmp.ne.s32.totalorder %s23, %s24
      %p33 = scmp.eq.s32.totalorder %s18, 0
      %p34 = por %p32, %p33
      %p35 = scmp.ne.s32.totalorder %s23, %s24
      %p36 = scmp.eq.s32.totalorder %s19, 2
      %p37 = por %p35, %p36
      %p39 = scmp.ne.s32.totalorder %s24, %s38
      %p40 = scmp.eq.s32.totalorder %s19, 0
      %p41 = por %p39, %p40
      %s42 = ssub.s32 %s13, %s20
      %p43 = scmp.eq.s32.totalorder %s42, 0
      %s45 = sadd.s32 %s44, 1
      %s46 = scalar_select %p43, %s44, %s45
      %p49 = pneg %p43
      %p50 = scmp.eq.s32.totalorder %s13, 2
      %p51 = por %p49, %p50
      %p52 = scmp.ne.s32.totalorder %s44, %s47
      %p53 = scmp.eq.s32.totalorder %s13, 0
      %p54 = por %p52, %p53
      %p55 = scmp.ne.s32.totalorder %s44, %s47
      %p56 = scmp.eq.s32.totalorder %s18, 2
      %p57 = por %p55, %p56
      %p58 = scmp.ne.s32.totalorder %s47, %s48
      %p59 = scmp.eq.s32.totalorder %s18, 0
      %p60 = por %p58, %p59
      %p61 = scmp.ne.s32.totalorder %s47, %s48
      %p62 = scmp.eq.s32.totalorder %s19, 2
      %p63 = por %p61, %p62
      %p65 = scmp.ne.s32.totalorder %s48, %s64
      %p66 = scmp.eq.s32.totalorder %s19, 0
      %p67 = por %p65, %p66
      %s69 = sadd.s32 %s68, 1
      %p72 = scmp.eq.s32.totalorder %s13, 2
      %p73 = scmp.ne.s32.totalorder %s68, %s70
      %p74 = scmp.eq.s32.totalorder %s13, 0
      %p75 = por %p73, %p74
      %p76 = scmp.ne.s32.totalorder %s68, %s70
      %p77 = scmp.eq.s32.totalorder %s18, 2
      %p78 = por %p76, %p77
      %p79 = scmp.ne.s32.totalorder %s70, %s71
      %p80 = scmp.eq.s32.totalorder %s18, 0
      %p81 = por %p79, %p80
      %p82 = scmp.ne.s32.totalorder %s70, %s71
      %p83 = scmp.eq.s32.totalorder %s19, 2
      %p84 = por %p82, %p83
      %p86 = scmp.ne.s32.totalorder %s71, %s85
      %p87 = scmp.eq.s32.totalorder %s19, 0
      %p88 = por %p86, %p87
      %p89 = scmp.le.s32.totalorder 1, %s13
      %p90 = scmp.lt.s32.totalorder %s13, 4
      %p91 = pnand %p89, %p90
      %p92 = pneg %p91
      // Predicated region
      $region9: #{tpu_custom_call.1} parent=5 // pred_check
        _
      $region10: #{tpu_custom_call.1} parent=5 // pred_check_branch
        %94 = sbr.rel (%p91) target = $region12
      $region11: #{tpu_custom_call.1} parent=5 // pred_region
        %s95 = ssub.s32 %s13, 1
        // Predicated region
        $region13: #{tpu_custom_call.1} parent=11 // pred_check
          %p96 = pneg %p34
        $region14: #{tpu_custom_call.1} parent=11 // pred_check_branch
          %98 = sbr.rel (%p96) target = $region16
        $region15: #{tpu_custom_call.1} parent=11 // pred_region
          %100 = vsyncadd [#allocation4], 0
          %s102 = sshll.u32 %s0, 4
          %s103 = int_to_ptr.hbm [resolvable:$true] %s102
          %s104 = sshll.u32 [#allocation3], 4
          %s105 = int_to_ptr.vmem [resolvable:$true] %s104
          %107 = dma.hbm_to_vmem [thread:$0]  %s103, 64, %s105, [#allocation4]
        $region16: #{tpu_custom_call.1} parent=11 // pred_fallthru
          _
      $region12: #{tpu_custom_call.1} parent=5 // pred_fallthru
        _
      %p108 = scmp.lt.s32.totalorder %s13, 3
      // Predicated region
      $region17: #{tpu_custom_call.1} parent=5 // pred_check
        %p109 = pneg %p108
      $region18: #{tpu_custom_call.1} parent=5 // pred_check_branch
        %111 = sbr.rel (%p109) target = $region20
      $region19: #{tpu_custom_call.1} parent=5 // pred_region
        // Predicated region
        $region21: #{tpu_custom_call.1} parent=19 // pred_check
          %p112 = pneg %p54
        $region22: #{tpu_custom_call.1} parent=19 // pred_check_branch
          %114 = sbr.rel (%p112) target = $region24
        $region23: #{tpu_custom_call.1} parent=19 // pred_region
          %s115 = sand.u32 %s44, 1
          %s116 = scalar_lea.sflag [#allocation7], %s115
          %s117 = sand.u32 %s44, 1
          %s118 = smul.addr %s117, 16
          %s119 = scalar_lea.vmem [#allocation6], %s118
          %s120 = smul.u32 2, %s13
          %s121 = ssub.s32 5, %s120
          %p122 = scmp.lt.s32.totalorder %s121, 2
          %s123 = scalar_select %p122, %s121, 2
          %s124 = smul.u32 8, %s123
          %s125 = ssub.s32 16, %s124
          %s126 = sshll.u32 %s125, 4
          %127 = vsyncadd %s116, %s126
          %p128 = scmp.ne.s32.totalorder 0, %s124
          %s129 = smul.addr %s120, 8
          %s130 = scalar_lea.hbm %s1, %s129
          %s131 = smul.u32 8, %s123
          %s132 = sshll.u32 %s130, 4
          %s133 = int_to_ptr.hbm [resolvable:$true] %s132
          %s134 = sshll.u32 %s119, 4
          %s135 = int_to_ptr.vmem [resolvable:$true] %s134
          %s136 = sshll.u32 %s131, 4
          %140 = dma.hbm_to_vmem [thread:$0]  (%p128), %s133, %s136, %s135, %s116, 128, 128, 8
        $region24: #{tpu_custom_call.1} parent=19 // pred_fallthru
          _
      $region20: #{tpu_custom_call.1} parent=5 // pred_fallthru
        _
      %p141 = scmp.le.s32.totalorder 1, %s13
      %p142 = scmp.lt.s32.totalorder %s13, 4
      %p143 = pnand %p141, %p142
      %p144 = pneg %p143
      // Predicated region
      $region25: #{tpu_custom_call.1} parent=5 // pred_check
        _
      $region26: #{tpu_custom_call.1} parent=5 // pred_check_branch
        %146 = sbr.rel (%p143) target = $region28
      $region27: #{tpu_custom_call.1} parent=5 // pred_region
        %s147 = ssub.s32 %s13, 1
        // Predicated region
        $region29: #{tpu_custom_call.1} parent=27 // pred_check
          %p148 = pneg %p34
        $region30: #{tpu_custom_call.1} parent=27 // pred_check_branch
          %150 = sbr.rel (%p148) target = $region32
        $region31: #{tpu_custom_call.1} parent=27 // pred_region
          %152 = dma.done [#allocation4], 64
        $region32: #{tpu_custom_call.1} parent=27 // pred_fallthru
          _
        %s153 = sand.u32 %s47, 1
        %s154 = scalar_lea.sflag [#allocation7], %s153
        %s155 = sand.u32 %s47, 1
        %s156 = smul.addr %s155, 16
        %s157 = scalar_lea.vmem [#allocation6], %s156
        // Predicated region
        $region33: #{tpu_custom_call.1} parent=27 // pred_check
          %p158 = pneg %p60
        $region34: #{tpu_custom_call.1} parent=27 // pred_check_branch
          %160 = sbr.rel (%p158) target = $region36
        $region35: #{tpu_custom_call.1} parent=27 // pred_region
          %162 = dma.done %s154, 256
        $region36: #{tpu_custom_call.1} parent=27 // pred_fallthru
          _
        %p163 = pneg %p34
        %p164 = pneg %p31
        %s165 = sand.u32 %s47, 1
        %s166 = scalar_lea.sflag [#allocation7], %s165
        %s167 = sand.u32 %s47, 1
        %s168 = smul.addr %s167, 16
        %s169 = scalar_lea.vmem [#allocation6], %s168
        %p170 = pneg %p60
        %p171 = pneg %p57
        %p172 = pneg %p81
        %p173 = pneg %p78
        %s174 = smul.u32 2, %s18
        %s175 = ssub.s32 5, %s174
        %p176 = scmp.lt.s32.totalorder %s175, 2
        %s177 = scalar_select %p176, %s175, 2
        %s178 = smul.u32 8, %s177
        %p179 = scmp.eq.s32.totalorder %s18, 0
        // Predicated region
        $region37: #{tpu_custom_call.1} parent=27 // pred_check
          %p180 = pneg %p179
        $region38: #{tpu_custom_call.1} parent=27 // pred_check_branch
          %182 = sbr.rel (%p180) target = $region40
        $region39: #{tpu_custom_call.1} parent=27 // pred_region
          %183 = vst [vmem:[#allocation2] sm:$0x1] 0.0
        $region40: #{tpu_custom_call.1} parent=27 // pred_fallthru
          _
        %v184 = vld [vmem:[%s157] sm:$0xff]
        %v185 = vld [vmem:[%s157 + $0x8] sm:$0xff]
        %v186 = vlaneseq
        %v187 = vshrl.u32 %v186, 7
        %v188 = vadd.s32 %v187, 8
        %s189 = smul.u32 %s18, 16
        %v190 = vstv %s189
        %v191 = vadd.s32 %v187, %v190
        %v192 = vadd.s32 %v188, %v190
        %vm193 = vcmp.lt.s32.totalorder %v191, 40
        %vm194 = vcmp.lt.s32.totalorder %v192, 40
        %v195 = vsel %vm193, %v184, 0.0
        %v196 = vsel %vm194, %v185, 0.0
        %v197 = vld [vmem:[#allocation2] sm:$0x1]
        %v198 = vadd.f32 %v195, %v196
        %v199 = vrot.slane %v198, 4
        %v200 = vadd.f32 %v198, %v199
        %v201 = vrot.slane %v200, 2
        %v202 = vadd.f32 %v200, %v201
        %v203 = vrot.slane %v202, 1
        %v204 = vadd.f32 %v202, %v203
        %v205 = vadd.f32 %v197, %v204
        %206 = vst [vmem:[#allocation2] sm:$0x1] %v205
        %p207 = scmp.eq.s32.totalorder %s18, 2
        // Predicated region
        $region41: #{tpu_custom_call.1} parent=27 // pred_check
          %p208 = pneg %p207
        $region42: #{tpu_custom_call.1} parent=27 // pred_check_branch
          %210 = sbr.rel (%p208) target = $region44
        $region43: #{tpu_custom_call.1} parent=27 // pred_region
          %v211 = vld [vmem:[#allocation3] sm:$0x7]
          %v212 = vld [vmem:[#allocation2] sm:$0x1]
          %v213 = vmul.f32 %v212, 0.025
          %v214 = vmax.f32 %v211, 0.0
          %v215 = vand.u32 2147483647, %v211
          %v216 = vsub.f32 0.0, %v215
          %v217 = vmul.f32 %v216, 1.442695
          %v218 = vpow.pop %v217
          %v219 = vadd.f32 %v218, 1.0
          %v220 = vlog2.pop %v219
          %v221 = vmul.f32 %v220, 0.6931472
          %v222 = vmul.f32 -0.5, %v218
          %v223 = vadd.f32 %v222, 1.0
          %v224 = vmul.f32 %v223, %v218
          %v225 = vand.u32 2147483647, %v218
          %vm226 = vcmp.lt.f32.partialorder %v225, 0.0004427343
          %v227 = vsel %vm226, %v224, %v221
          %v228 = vadd.f32 %v214, %v227
          %v230 = vperm.slane %v213, 0
          %v232 = vmul.f32 %v211, %v230
          %v233 = vsub.f32 %v228, %v232
          %vm234 = vcmask 1042432
          %v235 = vsel %vm234, %v233, 0.0
          %236 = vadd.xlane.f32.xlu0 %v235
          %v237 = vpop.xlane.xlu0 %236
          %v238 = vrot.slane %v237, 4
          %v239 = vadd.f32 %v237, %v238
          %v240 = vrot.slane %v239, 2
          %v241 = vadd.f32 %v239, %v240
          %v242 = vrot.slane %v241, 1
          %v243 = vadd.f32 %v241, %v242
          %s244 = vtos %v243
          %s245 = smul.f32 %s244, 0.0078125
          %s246 = scalar_lea.smem [#allocation8], 0
          %247 = sst [smem:[%s246]] %s245
        $region44: #{tpu_custom_call.1} parent=27 // pred_fallthru
          _
        // Predicated region
        $region45: #{tpu_custom_call.1} parent=27 // pred_check
          %p248 = pneg %p78
        $region46: #{tpu_custom_call.1} parent=27 // pred_check_branch
          %250 = sbr.rel (%p248) target = $region48
        $region47: #{tpu_custom_call.1} parent=27 // pred_region
          %252 = vsyncadd [#allocation5], 0
          %s254 = sshll.u32 %s2, 4
          %s255 = int_to_ptr.hbm [resolvable:$true] %s254
          %257 = dma.smem_to_hbm [#allocation8], 16, %s255, [#allocation5]
        $region48: #{tpu_custom_call.1} parent=27 // pred_fallthru
          _
        // Predicated region
        $region49: #{tpu_custom_call.1} parent=27 // pred_check
          %p258 = pneg %p78
        $region50: #{tpu_custom_call.1} parent=27 // pred_check_branch
          %260 = sbr.rel (%p258) target = $region52
        $region51: #{tpu_custom_call.1} parent=27 // pred_region
          %262 = dma.done [#allocation5], 16
        $region52: #{tpu_custom_call.1} parent=27 // pred_fallthru
          _
        %263 = sfence
      $region28: #{tpu_custom_call.1} parent=5 // pred_fallthru
        _
      %p264 = scmp.le.s32.totalorder 2, %s13
      // Predicated region
      $region53: #{tpu_custom_call.1} parent=5 // pred_check
        %p265 = pneg %p264
      $region54: #{tpu_custom_call.1} parent=5 // pred_check_branch
        %267 = sbr.rel (%p265) target = $region56
      $region55: #{tpu_custom_call.1} parent=5 // pred_region
        %s268 = ssub.s32 %s13, 2
      $region56: #{tpu_custom_call.1} parent=5 // pred_fallthru
        _
    $region6: #{tpu_custom_call.1} parent=1 // loop_footer
      %s17 = sadd.s32 1, %s13
    $region7: #{tpu_custom_call.1} parent=1 // loop_footer_branch
      %12 = sbr.rel target = $region3
    $region8: #{tpu_custom_call.1} parent=1 // loop_exit
      _
    %269 = vsyncpa [#allocation4], 1
    %s270 = scalar_lea.sflag [#allocation4], 1
    %271 = vsyncpa %s270, 1
    %272 = vsyncpa [#allocation7], 1
    %s273 = scalar_lea.sflag [#allocation7], 1
    %274 = vsyncpa %s273, 1
    %275 = vsyncpa [#allocation5], 1
    %s276 = scalar_lea.sflag [#allocation5], 1
    %277 = vsyncpa %s276, 1

</llo_original>
